<compile_context>
chip_gen: v5e
topology: v5e:2x2
jax: 0.10.0
libtpu: 0.0.40
codegen_flags: <defaults>
</compile_context>

<pallas_src>
import functools

import jax
import jax.numpy as jnp
from jax.experimental import pallas as pl
from jax.experimental.pallas import tpu as pltpu


def _round_up(x, m):
    return ((x + m - 1) // m) * m


def _quantile_loss_kernel(q_ref, preds_ref, target_ref, o_ref, acc_ref, *, inv_b):
    """One (tr, tc) tile: pinball -> scalar partial sum -> running accumulator."""
    i = pl.program_id(0)
    j = pl.program_id(1)

    @pl.when(jnp.logical_and(i == 0, j == 0))
    def _():
        acc_ref[...] = jnp.zeros_like(acc_ref)

    q = q_ref[...]                                                    # (1, tc)
    error = target_ref[...].astype(jnp.float32) - preds_ref[...].astype(jnp.float32)
    pinball = jnp.maximum((q - 1.0) * error, q * error)               # (tr, tc)
    acc_ref[...] += jnp.sum(pinball, keepdims=True)                   # (1, 1)

    @pl.when(jnp.logical_and(i == pl.num_programs(0) - 1,
                             j == pl.num_programs(1) - 1))
    def _():
        o_ref[...] = acc_ref[...] * inv_b


def quantile_loss(preds, target, quantiles=(0.1, 0.5, 0.9),
                  *, max_tile_rows=256, max_tile_cols=2048):
    """Pallas implementation of QuantileLoss.forward -> scalar loss.

    preds / target: (batch, num_quantiles, seq_len), same convention as the
    PyTorch module (dim 1 indexes quantiles).
    """
    assert preds.shape == target.shape, "preds/target must share (B, Q, S)"
    B, Q, S = preds.shape
    assert Q == len(quantiles)

    N = Q * S
    # Lane-dense 2D layout: row-major flatten of (Q, S) -> column c belongs to
    # quantile c // S, matched by the repeated coefficient row below.
    p2 = preds.reshape(B, N)
    t2 = target.reshape(B, N)
    q_row = jnp.repeat(jnp.asarray(quantiles, dtype=jnp.float32), S)   # (N,)

    # Tile sizes: last dim a multiple of 128 (lanes), rows a multiple of 8
    # (sublanes). Per-input tile <= 256*2048*4B = 2 MiB -> double-buffered
    # footprint stays well inside scoped VMEM on v5e/v6e/v7x.
    tc = min(_round_up(N, 128), max_tile_cols)
    tr = min(_round_up(B, 8), max_tile_rows)
    cols_pad = _round_up(N, tc)
    rows_pad = _round_up(B, tr)

    # Zero padding is exact: error == 0 on padded elements -> pinball == 0.
    if cols_pad != N:
        p2 = jnp.pad(p2, ((0, 0), (0, cols_pad - N)))
        t2 = jnp.pad(t2, ((0, 0), (0, cols_pad - N)))
        q_row = jnp.pad(q_row, (0, cols_pad - N))
    if rows_pad != B:
        p2 = jnp.pad(p2, ((0, rows_pad - B), (0, 0)))
        t2 = jnp.pad(t2, ((0, rows_pad - B), (0, 0)))
    q_row = q_row.reshape(1, cols_pad)

    grid = (rows_pad // tr, cols_pad // tc)
    kernel = functools.partial(_quantile_loss_kernel, inv_b=1.0 / B)

    out = pl.pallas_call(
        kernel,
        out_shape=jax.ShapeDtypeStruct((1, 1), jnp.float32),
        grid=grid,
        in_specs=[
            pl.BlockSpec((1, tc), lambda i, j: (0, j)),    # quantile coefficients
            pl.BlockSpec((tr, tc), lambda i, j: (i, j)),   # preds tile
            pl.BlockSpec((tr, tc), lambda i, j: (i, j)),   # target tile
        ],
        # Output block is the same for every grid step -> resident accumulator
        # target; both grid axes are reduction axes -> "arbitrary".
        out_specs=pl.BlockSpec((1, 1), lambda i, j: (0, 0)),
        scratch_shapes=[pltpu.VMEM((1, 1), jnp.float32)],
        compiler_params=pltpu.CompilerParams(
            dimension_semantics=("arbitrary", "arbitrary")),
    )(q_row, p2, t2)
    return out[0, 0]


def quantile_loss_ref(preds, target, quantiles=(0.1, 0.5, 0.9)):
    """Pure-JAX reference mirroring the PyTorch forward exactly."""
    error = target - preds
    losses = []
    for i, q in enumerate(quantiles):
        e = error[:, i, :]
        losses.append(jnp.maximum((q - 1.0) * e, q * e))
    cat = jnp.concatenate(losses, axis=1)        # (B, Q*S)
    return jnp.mean(jnp.sum(cat, axis=1))


if __name__ == "__main__":
    key = jax.random.PRNGKey(0)
    quantiles = (0.1, 0.5, 0.9)

    # Small shape matching the module convention: (batch, quantiles_num, seq_len).
    k1, k2 = jax.random.split(key)
    B, Q, S = 2, 3, 8
    preds = jax.random.normal(k1, (B, Q, S), dtype=jnp.float32)
    target = jax.random.normal(k2, (B, Q, S), dtype=jnp.float32)

    loss = jax.block_until_ready(quantile_loss(preds, target, quantiles))
    ref = quantile_loss_ref(preds, target, quantiles)
    assert jnp.allclose(loss, ref, rtol=1e-5, atol=1e-5), (loss, ref)

    # Second check exercises the tiled grid + zero-padding path (grid = (2, 2)).
    k3, k4 = jax.random.split(k1)
    B2, S2 = 10, 50
    preds2 = jax.random.normal(k3, (B2, Q, S2), dtype=jnp.float32)
    target2 = jax.random.normal(k4, (B2, Q, S2), dtype=jnp.float32)
    loss2 = jax.block_until_ready(
        quantile_loss(preds2, target2, quantiles,
                      max_tile_rows=8, max_tile_cols=128))
    ref2 = quantile_loss_ref(preds2, target2, quantiles)
    assert jnp.allclose(loss2, ref2, rtol=1e-5, atol=1e-4), (loss2, ref2)

    print("KERNEL_OK")
</pallas_src>

<mosaic_0001>
module attributes {stable_mosaic.version = 11 : i64} {
  func.func @_quantile_loss_kernel(%arg0: i32, %arg1: i32, %arg2: memref<1x128xf32, #tpu.memory_space<vmem>>, %arg3: memref<8x128xf32, #tpu.memory_space<vmem>>, %arg4: memref<8x128xf32, #tpu.memory_space<vmem>>, %arg5: memref<1x1xf32, #tpu.memory_space<vmem>>, %arg6: memref<1x1xf32, #tpu.memory_space<vmem>>) attributes {dimension_semantics = [#tpu.dimension_semantics<arbitrary>, #tpu.dimension_semantics<arbitrary>], iteration_bounds = array<i64: 1, 1>, scalar_prefetch = 0 : i64, scratch_operands = 1 : i64, tpu.core_type = #tpu.core_type<tc>, window_params = [{transform_indices = @transform_0, window_bounds = array<i64: 1, 128>}, {transform_indices = @transform_1, window_bounds = array<i64: 8, 128>}, {transform_indices = @transform_2, window_bounds = array<i64: 8, 128>}, {pipeline_mode = #tpu.pipeline_mode<synchronous>, transform_indices = @transform_3, window_bounds = array<i64: 1, 1>}]} {
    %c0_i32 = arith.constant 0 : i32
    %0 = arith.cmpi eq, %arg0, %c0_i32 : i32
    %c0_i32_0 = arith.constant 0 : i32
    %1 = arith.cmpi eq, %arg1, %c0_i32_0 : i32
    %2 = arith.andi %0, %1 : i1
    %3 = arith.extui %2 : i1 to i32
    %c0_i32_1 = arith.constant 0 : i32
    %4 = arith.cmpi ne, %3, %c0_i32_1 : i32
    scf.if %4 {
      %cst_15 = arith.constant 0.000000e+00 : f32
      %29 = vector.broadcast %cst_15 : f32 to vector<1x1xf32>
      %c0_16 = arith.constant 0 : index
      %c0_17 = arith.constant 0 : index
      %30 = vector.load %arg6[%c0_16, %c0_17] : memref<1x1xf32, #tpu.memory_space<vmem>>, vector<1x1xf32>
      tpu.vector_store %arg6[%c0_16, %c0_17], %29 {strides = array<i32>} : memref<1x1xf32, #tpu.memory_space<vmem>>, vector<1x1xf32>,
    } else {
    }
    %c0 = arith.constant 0 : index
    %c0_2 = arith.constant 0 : index
    %5 = vector.load %arg2[%c0, %c0_2] : memref<1x128xf32, #tpu.memory_space<vmem>>, vector<1x128xf32>
    %c0_3 = arith.constant 0 : index
    %c0_4 = arith.constant 0 : index
    %6 = vector.load %arg4[%c0_3, %c0_4] : memref<8x128xf32, #tpu.memory_space<vmem>>, vector<8x128xf32>
    %c0_5 = arith.constant 0 : index
    %c0_6 = arith.constant 0 : index
    %7 = vector.load %arg3[%c0_5, %c0_6] : memref<8x128xf32, #tpu.memory_space<vmem>>, vector<8x128xf32>
    %8 = arith.subf %6, %7 : vector<8x128xf32>
    %cst = arith.constant 1.000000e+00 : f32
    %9 = vector.broadcast %cst : f32 to vector<1x128xf32>
    %10 = arith.subf %5, %9 : vector<1x128xf32>
    %11 = vector.broadcast %10 : vector<1x128xf32> to vector<8x128xf32>
    %12 = arith.mulf %11, %8 : vector<8x128xf32>
    %13 = vector.broadcast %5 : vector<1x128xf32> to vector<8x128xf32>
    %14 = arith.mulf %13, %8 : vector<8x128xf32>
    %15 = arith.maximumf %12, %14 : vector<8x128xf32>
    %c0_7 = arith.constant 0 : index
    %c0_8 = arith.constant 0 : index
    %16 = vector.load %arg6[%c0_7, %c0_8] : memref<1x1xf32, #tpu.memory_space<vmem>>, vector<1x1xf32>
    %17 = vector.shape_cast %15 : vector<8x128xf32> to vector<1x8x128xf32>
    %cst_9 = arith.constant dense<0.000000e+00> : vector<1xf32>
    %18 = vector.multi_reduction <add>, %17, %cst_9 [1, 2] : vector<1x8x128xf32> to vector<1xf32>
    %19 = vector.shape_cast %18 : vector<1xf32> to vector<1x1x1xf32>
    %20 = vector.extract %19[0, 0, 0] : f32 from vector<1x1x1xf32>
    %21 = vector.broadcast %20 : f32 to vector<1x1xf32>
    %22 = arith.addf %16, %21 : vector<1x1xf32>
    %c0_10 = arith.constant 0 : index
    %c0_11 = arith.constant 0 : index
    %23 = vector.load %arg6[%c0_10, %c0_11] : memref<1x1xf32, #tpu.memory_space<vmem>>, vector<1x1xf32>
    tpu.vector_store %arg6[%c0_10, %c0_11], %22 {strides = array<i32>} : memref<1x1xf32, #tpu.memory_space<vmem>>, vector<1x1xf32>,
    %c0_i32_12 = arith.constant 0 : i32
    %24 = arith.cmpi eq, %arg0, %c0_i32_12 : i32
    %c0_i32_13 = arith.constant 0 : i32
    %25 = arith.cmpi eq, %arg1, %c0_i32_13 : i32
    %26 = arith.andi %24, %25 : i1
    %27 = arith.extui %26 : i1 to i32
    %c0_i32_14 = arith.constant 0 : i32
    %28 = arith.cmpi ne, %27, %c0_i32_14 : i32
    scf.if %28 {
      %c0_15 = arith.constant 0 : index
      %c0_16 = arith.constant 0 : index
      %29 = vector.load %arg6[%c0_15, %c0_16] : memref<1x1xf32, #tpu.memory_space<vmem>>, vector<1x1xf32>
      %cst_17 = arith.constant 5.000000e-01 : f32
      %30 = vector.broadcast %cst_17 : f32 to vector<1x1xf32>
      %31 = arith.mulf %29, %30 : vector<1x1xf32>
      %c0_18 = arith.constant 0 : index
      %c0_19 = arith.constant 0 : index
      %32 = vector.load %arg5[%c0_18, %c0_19] : memref<1x1xf32, #tpu.memory_space<vmem>>, vector<1x1xf32>
      tpu.vector_store %arg5[%c0_18, %c0_19], %31 {strides = array<i32>} : memref<1x1xf32, #tpu.memory_space<vmem>>, vector<1x1xf32>,
    } else {
    }
    return
  }
  func.func @transform_0(%arg0: i32, %arg1: i32) -> (i32, i32) {
    %c0_i32 = arith.constant 0 : i32
    %c0_i32_0 = arith.constant 0 : i32
    return %c0_i32, %arg1 : i32, i32
  }
  func.func @transform_1(%arg0: i32, %arg1: i32) -> (i32, i32) {
    %c0_i32 = arith.constant 0 : i32
    return %arg0, %arg1 : i32, i32
  }
  func.func @transform_2(%arg0: i32, %arg1: i32) -> (i32, i32) {
    %c0_i32 = arith.constant 0 : i32
    return %arg0, %arg1 : i32, i32
  }
  func.func @transform_3(%arg0: i32, %arg1: i32) -> (i32, i32) {
    %c0_i32 = arith.constant 0 : i32
    %c0_i32_0 = arith.constant 0 : i32
    %c0_i32_1 = arith.constant 0 : i32
    return %c0_i32, %c0_i32_0 : i32, i32
  }
}

</mosaic_0001>

<llo_original>
// kernel: tpu_custom_call.1
$region0: #{tpu_custom_call.1}
  #allocation0 [shape = 'u32[]', space=smem, size = 0x4, offset = 0x4, fixed_abs, tag = 'smem constant byte address 0x4 - core index']
  #allocation1 [shape = 'u32[72,128]{1,0:T(1,128)}', space=vmem, size = 0x9000, scoped, tag = 'internal scratch']
  #allocation2 [shape = 'f32[1,1]{1,0:T(1,128)}', space=vmem, size = 0x200, scoped, tag = 'scratch operand']
  %s0 = inlined_call_operand.hbm [shape: f32[1,128], index: 0, kind: input, shape index: {}]
  %s1 = inlined_call_operand.hbm [shape: f32[8,128], index: 1, kind: input, shape index: {}]
  %s2 = inlined_call_operand.hbm [shape: f32[8,128], index: 2, kind: input, shape index: {}]
  %s3 = inlined_call_operand.hbm [shape: f32[1,1], index: 3, kind: output, shape index: {}]
  %s4 = sld [smem:[#allocation0]]
  $region42: #{tpu_custom_call.1} parent=0
    _
  %s6 = ssub.s32 1, %s4
  %s7 = scalar_select 0, %s6, %s4
  $region1: #{tpu_custom_call.1} parent=0
    #allocation3 [shape = 'u8[512]{0}', space=vmem, size = 0x400, scoped, tag = 'input window, operand 0, single buffered']
    #allocation4 [shape = 's32[1]{0}', space=sflag, size = 0x4, scoped, tag = 'scoped memory for tpu_custom_call.1']
    #allocation5 [shape = 's32[1]{0}', space=sflag, size = 0x4, scoped, tag = 'scoped memory for tpu_custom_call.1']
    #allocation6 [shape = 'u8[4096]{0}', space=vmem, size = 0x1000, scoped, tag = 'input window, operand 1, single buffered']
    #allocation7 [shape = 's32[1]{0}', space=sflag, size = 0x4, scoped, tag = 'scoped memory for tpu_custom_call.1']
    #allocation8 [shape = 'u8[4096]{0}', space=vmem, size = 0x1000, scoped, tag = 'input window, operand 2, single buffered']
    #allocation9 [shape = 'u8[512]{0}', space=vmem, size = 0x400, scoped, tag = 'output window, operand 0, single buffered']
    %8 = vsyncpa [#allocation4], 0
    %9 = vsyncpa [#allocation7], 0
    %10 = vsyncpa [#allocation5], 0
    // Predicated region
    $region2: #{tpu_custom_call.1} parent=1 // pred_check
      _
    $region3: #{tpu_custom_call.1} parent=1 // pred_check_branch
      %12 = sbr.rel (0) target = $region5
    $region4: #{tpu_custom_call.1} parent=1 // pred_region
      %14 = vsyncadd [#allocation4], 0
      %s16 = sshll.u32 %s0, 4
      %s17 = int_to_ptr.hbm [resolvable:$true] %s16
      %s18 = sshll.u32 [#allocation3], 4
      %s19 = int_to_ptr.vmem [resolvable:$true] %s18
      %21 = dma.hbm_to_vmem [thread:$0]  %s17, 16, %s19, [#allocation4]
    $region5: #{tpu_custom_call.1} parent=1 // pred_fallthru
      _
    // Predicated region
    $region6: #{tpu_custom_call.1} parent=1 // pred_check
      _
    $region7: #{tpu_custom_call.1} parent=1 // pred_check_branch
      %23 = sbr.rel (0) target = $region9
    $region8: #{tpu_custom_call.1} parent=1 // pred_region
      %25 = vsyncadd [#allocation7], 0
      %s27 = sshll.u32 %s1, 4
      %s28 = int_to_ptr.hbm [resolvable:$true] %s27
      %s29 = sshll.u32 [#allocation6], 4
      %s30 = int_to_ptr.vmem [resolvable:$true] %s29
      %32 = dma.hbm_to_vmem [thread:$0]  %s28, 128, %s30, [#allocation7]
    $region9: #{tpu_custom_call.1} parent=1 // pred_fallthru
      _
    // Predicated region
    $region10: #{tpu_custom_call.1} parent=1 // pred_check
      _
    $region11: #{tpu_custom_call.1} parent=1 // pred_check_branch
      %34 = sbr.rel (0) target = $region13
    $region12: #{tpu_custom_call.1} parent=1 // pred_region
      %36 = vsyncadd [#allocation7], 0
      %s38 = sshll.u32 %s2, 4
      %s39 = int_to_ptr.hbm [resolvable:$true] %s38
      %s40 = sshll.u32 [#allocation8], 4
      %s41 = int_to_ptr.vmem [resolvable:$true] %s40
      %43 = dma.hbm_to_vmem [thread:$0]  %s39, 128, %s41, [#allocation7]
    $region13: #{tpu_custom_call.1} parent=1 // pred_fallthru
      _
    // Predicated region
    $region14: #{tpu_custom_call.1} parent=1 // pred_check
      _
    $region15: #{tpu_custom_call.1} parent=1 // pred_check_branch
      %45 = sbr.rel (0) target = $region17
    $region16: #{tpu_custom_call.1} parent=1 // pred_region
      %47 = dma.done [#allocation4], 16
    $region17: #{tpu_custom_call.1} parent=1 // pred_fallthru
      _
    // Predicated region
    $region18: #{tpu_custom_call.1} parent=1 // pred_check
      _
    $region19: #{tpu_custom_call.1} parent=1 // pred_check_branch
      %49 = sbr.rel (0) target = $region21
    $region20: #{tpu_custom_call.1} parent=1 // pred_region
      %51 = dma.done [#allocation7], 128
    $region21: #{tpu_custom_call.1} parent=1 // pred_fallthru
      _
    // Predicated region
    $region22: #{tpu_custom_call.1} parent=1 // pred_check
      _
    $region23: #{tpu_custom_call.1} parent=1 // pred_check_branch
      %53 = sbr.rel (0) target = $region25
    $region24: #{tpu_custom_call.1} parent=1 // pred_region
      %55 = dma.done [#allocation7], 128
    $region25: #{tpu_custom_call.1} parent=1 // pred_fallthru
      _
    %p56 = scmp.eq.s32.totalorder 0, 0
    %p57 = scmp.eq.s32.totalorder 0, 0
    %p58 = pnand %p56, %p57
    %p59 = pneg %p58
    // Predicated region
    $region26: #{tpu_custom_call.1} parent=1 // pred_check
      _
    $region27: #{tpu_custom_call.1} parent=1 // pred_check_branch
      %61 = sbr.rel (%p58) target = $region29
    $region28: #{tpu_custom_call.1} parent=1 // pred_region
      %vm62 = vcmask 0
      %63 = vst.msk [vmem:[#allocation2] sm:$0x1] %vm62, 0.0
    $region29: #{tpu_custom_call.1} parent=1 // pred_fallthru
      _
    %v64 = vld [vmem:[#allocation3] sm:$0x1]
    %v65 = vld [vmem:[#allocation8] sm:$0xff]
    %v66 = vld [vmem:[#allocation6] sm:$0xff]
    %v67 = vsub.f32 %v65, %v66
    %v68 = vsub.f32 %v64, 1.0
    %v70 = vperm.slane %v68, 0
    %v72 = vmul.f32 %v70, %v67
    %v74 = vperm.slane %v64, 0
    %v76 = vmul.f32 %v74, %v67
    %v77 = vmax.f32 %v72, %v76
    %v78 = vld [vmem:[#allocation2] sm:$0x1]
    %79 = vadd.xlane.f32.xlu0 %v77
    %v80 = vpop.xlane.xlu0 %79
    %v81 = vrot.slane %v80, 4
    %v82 = vadd.f32 %v80, %v81
    %v83 = vrot.slane %v82, 2
    %v84 = vadd.f32 %v82, %v83
    %v85 = vrot.slane %v84, 1
    %v86 = vadd.f32 %v84, %v85
    %s87 = vtos %v86
    %v88 = vstv %s87
    %v89 = vadd.f32 %v78, %v88
    %vm90 = vcmask 0
    %91 = vst.msk [vmem:[#allocation2] sm:$0x1] %vm90, %v89
    // Predicated region
    $region30: #{tpu_custom_call.1} parent=1 // pred_check
      _
    $region31: #{tpu_custom_call.1} parent=1 // pred_check_branch
      %93 = sbr.rel (%p58) target = $region33
    $region32: #{tpu_custom_call.1} parent=1 // pred_region
      %v94 = vld [vmem:[#allocation2] sm:$0x1]
      %v95 = vmul.f32 %v94, 0.5
      %96 = vst.msk [vmem:[#allocation9] sm:$0x1] %vm90, %v95
    $region33: #{tpu_custom_call.1} parent=1 // pred_fallthru
      _
    // Predicated region
    $region34: #{tpu_custom_call.1} parent=1 // pred_check
      _
    $region35: #{tpu_custom_call.1} parent=1 // pred_check_branch
      %98 = sbr.rel (0) target = $region37
    $region36: #{tpu_custom_call.1} parent=1 // pred_region
      %100 = vsyncadd [#allocation5], 0
      %s102 = sshll.u32 [#allocation9], 4
      %s103 = int_to_ptr.vmem [resolvable:$true] %s102
      %s104 = sshll.u32 %s3, 4
      %s105 = int_to_ptr.hbm [resolvable:$true] %s104
      %107 = dma.vmem_to_hbm [thread:$0]  %s103, 16, %s105, [#allocation5]
    $region37: #{tpu_custom_call.1} parent=1 // pred_fallthru
      _
    // Predicated region
    $region38: #{tpu_custom_call.1} parent=1 // pred_check
      _
    $region39: #{tpu_custom_call.1} parent=1 // pred_check_branch
      %109 = sbr.rel (0) target = $region41
    $region40: #{tpu_custom_call.1} parent=1 // pred_region
      %111 = dma.done [#allocation5], 16
    $region41: #{tpu_custom_call.1} parent=1 // pred_fallthru
      _
    %112 = vsyncpa [#allocation4], 1
    %113 = vsyncpa [#allocation7], 1
    %114 = vsyncpa [#allocation5], 1

</llo_original>
